<compile_context>
chip_gen: v7x
topology: tpu7x:2x2x1
jax: 0.10.0
libtpu: 0.0.40
codegen_flags: <defaults>
</compile_context>

<pallas_src>
import functools

import jax
import jax.numpy as jnp
from jax import lax
from jax.experimental import pallas as pl
from jax.experimental.pallas import tpu as pltpu

KH, KW = 3, 3          # kernel size
PAD = 1                # spatial padding (same-size output)
NEG_SLOPE = 0.1        # LeakyReLU slope


def _round_up(x, m):
    return ((x + m - 1) // m) * m


def cnn_block_kernel(x_ref, w_ref, b_ref, o_ref, p_ref, *, H, W):
    """Fused 3x3 conv (stride 1, pad 1) + LeakyReLU(0.1), whole batch at once.

    x_ref: (N, CinP, H*W)        input, channel-padded, spatial axis on lanes
    w_ref: (Cout, KH*KW*CinP)    weights, channel-padded columns are zero
    b_ref: (Cout, 1)             bias
    o_ref: (N, Cout, H*W)        output, lane-dense spatial axis
    p_ref: (KH*KW*CinP, N*H*W)   im2col patch scratch (one GEMM for the batch)
    """
    N, CinP, S = x_ref.shape
    Cout, K = w_ref.shape

    x = x_ref[...]                                       # (N, CinP, S) f32

    # ---- boundary masks, computed ONCE (hoisted out of the tap loop) -------
    pos = lax.broadcasted_iota(jnp.int32, (1, 1, S), 2)
    if (W & (W - 1)) == 0:                               # power-of-two width: bit ops
        h_idx = jnp.right_shift(pos, W.bit_length() - 1)
        w_idx = jnp.bitwise_and(pos, W - 1)
    else:                                                # general fallback (untested path)
        h_idx = pos // W
        w_idx = pos - h_idx * W

    row_mask = {-1: h_idx >= 1, 0: None, 1: h_idx < H - 1}
    col_mask = {-1: w_idx >= 1, 0: None, 1: w_idx < W - 1}
    masks = {}
    for dh in (-1, 0, 1):
        for dw in (-1, 0, 1):
            rm, cm = row_mask[dh], col_mask[dw]
            if rm is None:
                masks[(dh, dw)] = cm
            elif cm is None:
                masks[(dh, dw)] = rm
            else:
                masks[(dh, dw)] = rm & cm                # 4 corner ANDs, once

    # ---- im2col: 9 lane-rolled + masked taps, all stores full 8x128 tiles --
    for kh in range(KH):
        for kw_ in range(KW):
            dh, dw = kh - PAD, kw_ - PAD
            d = dh * W + dw
            shifted = x if d == 0 else pltpu.roll(x, (-d) % S, axis=2)
            m = masks[(dh, dw)]
            tap = shifted if m is None else jnp.where(m, shifted, 0.0)
            t = kh * KW + kw_
            for n in range(N):                           # static; S % 128 == 0
                p_ref[t * CinP:(t + 1) * CinP, n * S:(n + 1) * S] = tap[n]

    # ---- ONE fused GEMM over the whole batch: (Cout,K) @ (K,N*S) -----------
    acc = jnp.dot(w_ref[...], p_ref[...], preferred_element_type=jnp.float32)
    acc = acc + b_ref[...]                               # (Cout, 1) lane-broadcast
    acc = jnp.where(acc >= 0, acc, NEG_SLOPE * acc)      # LeakyReLU(0.1)
    acc = acc.astype(o_ref.dtype)                        # (Cout, N*S)
    for n in range(N):                                   # free vreg-boundary slice
        o_ref[n] = acc[:, n * S:(n + 1) * S]


@jax.jit
def cnn_block_forward(x_nchw, w_hwio, bias):
    """x_nchw: (N, Cin, H, W) -> (N, Cout, H, W); matches CNN_Block.forward."""
    N, Cin, H, W = x_nchw.shape
    Cout = w_hwio.shape[-1]
    S = H * W
    CinP = _round_up(Cin, 8)                 # sublane-aligned channel blocks
    K = KH * KW * CinP

    # Free contiguous collapse + tiny channel pad (makes every in-kernel tap
    # store a full, unmasked 8-sublane tile). No wrapper transposes of x.
    x_flat = x_nchw.reshape(N, Cin, S)
    if CinP != Cin:
        x_flat = jnp.pad(x_flat, ((0, 0), (0, CinP - Cin), (0, 0)))

    # One-time (tiny) parameter prep: HWIO -> (Cout, KH*KW*CinP); padded
    # channel columns are zero so they contribute nothing.
    w_r = jnp.transpose(w_hwio, (3, 0, 1, 2)).reshape(Cout, KH * KW, Cin)
    w_mat = jnp.pad(w_r, ((0, 0), (0, 0), (0, CinP - Cin))).reshape(Cout, K)
    b2d = bias.reshape(Cout, 1)

    # VMEM budget (scratch + double-buffered I/O + params) with headroom.
    vmem_bytes = 4 * (K * N * S + 2 * (N * CinP * S + N * Cout * S) + Cout * K + Cout)
    vmem_limit = int(max(2 * vmem_bytes, 2 * 1024 * 1024))

    flops = 2 * Cout * K * N * S + 3 * Cout * N * S
    bytes_accessed = 4 * (N * CinP * S + N * Cout * S + Cout * K + Cout)

    out_flat = pl.pallas_call(
        functools.partial(cnn_block_kernel, H=H, W=W),
        out_shape=jax.ShapeDtypeStruct((N, Cout, S), x_nchw.dtype),
        in_specs=[
            pl.BlockSpec((N, CinP, S), lambda: (0, 0, 0)),
            pl.BlockSpec((Cout, K), lambda: (0, 0)),
            pl.BlockSpec((Cout, 1), lambda: (0, 0)),
        ],
        out_specs=pl.BlockSpec((N, Cout, S), lambda: (0, 0, 0)),
        scratch_shapes=[pltpu.VMEM((K, N * S), jnp.float32)],
        compiler_params=pltpu.CompilerParams(vmem_limit_bytes=vmem_limit),
        cost_estimate=pl.CostEstimate(flops=flops, transcendentals=0,
                                      bytes_accessed=bytes_accessed),
    )(x_flat, w_mat, b2d)

    return out_flat.reshape(N, Cout, H, W)   # free reshape back to NCHW


def reference_forward(x_nchw, w_hwio, bias):
    """Pure-JAX reference (lax conv, NCHW throughout) for correctness checking."""
    y = lax.conv_general_dilated(
        x_nchw, w_hwio,
        window_strides=(1, 1),
        padding=((PAD, PAD), (PAD, PAD)),
        dimension_numbers=("NCHW", "HWIO", "NCHW"),
    ) + bias.reshape(1, -1, 1, 1)
    return jnp.where(y >= 0, y, NEG_SLOPE * y)


if __name__ == "__main__":
    # Small deterministic problem: batch=2, in_channels=4, out_channels=8, 16x16.
    N, Cin, Cout, H, W = 2, 4, 8, 16, 16

    key = jax.random.PRNGKey(0)
    kx, kwt, kb = jax.random.split(key, 3)

    x = jax.random.normal(kx, (N, Cin, H, W), dtype=jnp.float32)
    fan_in = Cin * KH * KW
    w = jax.random.normal(kwt, (KH, KW, Cin, Cout), dtype=jnp.float32) / jnp.sqrt(fan_in)
    b = jax.random.normal(kb, (Cout,), dtype=jnp.float32) * 0.01

    out = jax.block_until_ready(cnn_block_forward(x, w, b))
    ref = jax.block_until_ready(reference_forward(x, w, b))

    assert out.shape == (N, Cout, H, W)
    assert jnp.allclose(out, ref, atol=1e-5, rtol=1e-5), "mismatch vs reference conv"

    print("KERNEL_OK")
</pallas_src>

<mosaic_0001>
module attributes {stable_mosaic.version = 11 : i64} {
  func.func @cnn_block_kernel(%arg0: memref<2x8x256xf32, #tpu.memory_space<vmem>>, %arg1: memref<8x72xf32, #tpu.memory_space<vmem>>, %arg2: memref<8x1xf32, #tpu.memory_space<vmem>>, %arg3: memref<2x8x256xf32, #tpu.memory_space<vmem>>, %arg4: memref<72x512xf32, #tpu.memory_space<vmem>>) attributes {dimension_semantics = [], scalar_prefetch = 0 : i64, scratch_operands = 1 : i64, tpu.core_type = #tpu.core_type<tc>} {
    %c0 = arith.constant 0 : index
    %c0_0 = arith.constant 0 : index
    %c0_1 = arith.constant 0 : index
    %0 = vector.load %arg0[%c0, %c0_0, %c0_1] : memref<2x8x256xf32, #tpu.memory_space<vmem>>, vector<2x8x256xf32>
    %1 = tpu.iota {dimensions = array<i32: 2>} : vector<1x1x256xi32>
    %c4_i32 = arith.constant 4 : i32
    %2 = vector.broadcast %c4_i32 : i32 to vector<1x1x256xi32>
    %3 = arith.shrsi %1, %2 : vector<1x1x256xi32>
    %c15_i32 = arith.constant 15 : i32
    %4 = vector.broadcast %c15_i32 : i32 to vector<1x1x256xi32>
    %5 = arith.andi %1, %4 : vector<1x1x256xi32>
    %c1_i32 = arith.constant 1 : i32
    %6 = vector.broadcast %c1_i32 : i32 to vector<1x1x256xi32>
    %7 = arith.cmpi sge, %3, %6 : vector<1x1x256xi32>
    %c15_i32_2 = arith.constant 15 : i32
    %8 = vector.broadcast %c15_i32_2 : i32 to vector<1x1x256xi32>
    %9 = arith.cmpi slt, %3, %8 : vector<1x1x256xi32>
    %c1_i32_3 = arith.constant 1 : i32
    %10 = vector.broadcast %c1_i32_3 : i32 to vector<1x1x256xi32>
    %11 = arith.cmpi sge, %5, %10 : vector<1x1x256xi32>
    %c15_i32_4 = arith.constant 15 : i32
    %12 = vector.broadcast %c15_i32_4 : i32 to vector<1x1x256xi32>
    %13 = arith.cmpi slt, %5, %12 : vector<1x1x256xi32>
    %14 = arith.andi %7, %11 : vector<1x1x256xi1>
    %15 = arith.andi %7, %13 : vector<1x1x256xi1>
    %16 = arith.andi %9, %11 : vector<1x1x256xi1>
    %17 = arith.andi %9, %13 : vector<1x1x256xi1>
    %c17_i32 = arith.constant 17 : i32
    %18 = tpu.dynamic_rotate %0 by %c17_i32 dim 2 : vector<2x8x256xf32>, i32 -> vector<2x8x256xf32>
    %cst = arith.constant 0.000000e+00 : f32
    %19 = vector.shape_cast %14 : vector<1x1x256xi1> to vector<1x1x256xi1>
    %20 = vector.broadcast %19 : vector<1x1x256xi1> to vector<2x8x256xi1>
    %21 = vector.broadcast %cst : f32 to vector<2x8x256xf32>
    %22 = arith.select %20, %18, %21 : vector<2x8x256xi1>, vector<2x8x256xf32>
    %23 = vector.extract_strided_slice %22 {offsets = [0, 0, 0], sizes = [1, 8, 256], strides = [1, 1, 1]} : vector<2x8x256xf32> to vector<1x8x256xf32>
    %24 = vector.shape_cast %23 : vector<1x8x256xf32> to vector<8x256xf32>
    %c0_5 = arith.constant 0 : index
    %c0_6 = arith.constant 0 : index
    %25 = vector.load %arg4[%c0_5, %c0_6] : memref<72x512xf32, #tpu.memory_space<vmem>>, vector<8x256xf32>
    tpu.vector_store %arg4[%c0_5, %c0_6], %24 {strides = array<i32>} : memref<72x512xf32, #tpu.memory_space<vmem>>, vector<8x256xf32>,
    %26 = vector.extract_strided_slice %22 {offsets = [1, 0, 0], sizes = [1, 8, 256], strides = [1, 1, 1]} : vector<2x8x256xf32> to vector<1x8x256xf32>
    %27 = vector.shape_cast %26 : vector<1x8x256xf32> to vector<8x256xf32>
    %c0_7 = arith.constant 0 : index
    %c256 = arith.constant 256 : index
    %28 = vector.load %arg4[%c0_7, %c256] : memref<72x512xf32, #tpu.memory_space<vmem>>, vector<8x256xf32>
    tpu.vector_store %arg4[%c0_7, %c256], %27 {strides = array<i32>} : memref<72x512xf32, #tpu.memory_space<vmem>>, vector<8x256xf32>,
    %c16_i32 = arith.constant 16 : i32
    %29 = tpu.dynamic_rotate %0 by %c16_i32 dim 2 : vector<2x8x256xf32>, i32 -> vector<2x8x256xf32>
    %cst_8 = arith.constant 0.000000e+00 : f32
    %30 = vector.shape_cast %7 : vector<1x1x256xi1> to vector<1x1x256xi1>
    %31 = vector.broadcast %30 : vector<1x1x256xi1> to vector<2x8x256xi1>
    %32 = vector.broadcast %cst_8 : f32 to vector<2x8x256xf32>
    %33 = arith.select %31, %29, %32 : vector<2x8x256xi1>, vector<2x8x256xf32>
    %34 = vector.extract_strided_slice %33 {offsets = [0, 0, 0], sizes = [1, 8, 256], strides = [1, 1, 1]} : vector<2x8x256xf32> to vector<1x8x256xf32>
    %35 = vector.shape_cast %34 : vector<1x8x256xf32> to vector<8x256xf32>
    %c8 = arith.constant 8 : index
    %c0_9 = arith.constant 0 : index
    %36 = vector.load %arg4[%c8, %c0_9] : memref<72x512xf32, #tpu.memory_space<vmem>>, vector<8x256xf32>
    tpu.vector_store %arg4[%c8, %c0_9], %35 {strides = array<i32>} : memref<72x512xf32, #tpu.memory_space<vmem>>, vector<8x256xf32>,
    %37 = vector.extract_strided_slice %33 {offsets = [1, 0, 0], sizes = [1, 8, 256], strides = [1, 1, 1]} : vector<2x8x256xf32> to vector<1x8x256xf32>
    %38 = vector.shape_cast %37 : vector<1x8x256xf32> to vector<8x256xf32>
    %c8_10 = arith.constant 8 : index
    %c256_11 = arith.constant 256 : index
    %39 = vector.load %arg4[%c8_10, %c256_11] : memref<72x512xf32, #tpu.memory_space<vmem>>, vector<8x256xf32>
    tpu.vector_store %arg4[%c8_10, %c256_11], %38 {strides = array<i32>} : memref<72x512xf32, #tpu.memory_space<vmem>>, vector<8x256xf32>,
    %c15_i32_12 = arith.constant 15 : i32
    %40 = tpu.dynamic_rotate %0 by %c15_i32_12 dim 2 : vector<2x8x256xf32>, i32 -> vector<2x8x256xf32>
    %cst_13 = arith.constant 0.000000e+00 : f32
    %41 = vector.shape_cast %15 : vector<1x1x256xi1> to vector<1x1x256xi1>
    %42 = vector.broadcast %41 : vector<1x1x256xi1> to vector<2x8x256xi1>
    %43 = vector.broadcast %cst_13 : f32 to vector<2x8x256xf32>
    %44 = arith.select %42, %40, %43 : vector<2x8x256xi1>, vector<2x8x256xf32>
    %45 = vector.extract_strided_slice %44 {offsets = [0, 0, 0], sizes = [1, 8, 256], strides = [1, 1, 1]} : vector<2x8x256xf32> to vector<1x8x256xf32>
    %46 = vector.shape_cast %45 : vector<1x8x256xf32> to vector<8x256xf32>
    %c16 = arith.constant 16 : index
    %c0_14 = arith.constant 0 : index
    %47 = vector.load %arg4[%c16, %c0_14] : memref<72x512xf32, #tpu.memory_space<vmem>>, vector<8x256xf32>
    tpu.vector_store %arg4[%c16, %c0_14], %46 {strides = array<i32>} : memref<72x512xf32, #tpu.memory_space<vmem>>, vector<8x256xf32>,
    %48 = vector.extract_strided_slice %44 {offsets = [1, 0, 0], sizes = [1, 8, 256], strides = [1, 1, 1]} : vector<2x8x256xf32> to vector<1x8x256xf32>
    %49 = vector.shape_cast %48 : vector<1x8x256xf32> to vector<8x256xf32>
    %c16_15 = arith.constant 16 : index
    %c256_16 = arith.constant 256 : index
    %50 = vector.load %arg4[%c16_15, %c256_16] : memref<72x512xf32, #tpu.memory_space<vmem>>, vector<8x256xf32>
    tpu.vector_store %arg4[%c16_15, %c256_16], %49 {strides = array<i32>} : memref<72x512xf32, #tpu.memory_space<vmem>>, vector<8x256xf32>,
    %c1_i32_17 = arith.constant 1 : i32
    %51 = tpu.dynamic_rotate %0 by %c1_i32_17 dim 2 : vector<2x8x256xf32>, i32 -> vector<2x8x256xf32>
    %cst_18 = arith.constant 0.000000e+00 : f32
    %52 = vector.shape_cast %11 : vector<1x1x256xi1> to vector<1x1x256xi1>
    %53 = vector.broadcast %52 : vector<1x1x256xi1> to vector<2x8x256xi1>
    %54 = vector.broadcast %cst_18 : f32 to vector<2x8x256xf32>
    %55 = arith.select %53, %51, %54 : vector<2x8x256xi1>, vector<2x8x256xf32>
    %56 = vector.extract_strided_slice %55 {offsets = [0, 0, 0], sizes = [1, 8, 256], strides = [1, 1, 1]} : vector<2x8x256xf32> to vector<1x8x256xf32>
    %57 = vector.shape_cast %56 : vector<1x8x256xf32> to vector<8x256xf32>
    %c24 = arith.constant 24 : index
    %c0_19 = arith.constant 0 : index
    %58 = vector.load %arg4[%c24, %c0_19] : memref<72x512xf32, #tpu.memory_space<vmem>>, vector<8x256xf32>
    tpu.vector_store %arg4[%c24, %c0_19], %57 {strides = array<i32>} : memref<72x512xf32, #tpu.memory_space<vmem>>, vector<8x256xf32>,
    %59 = vector.extract_strided_slice %55 {offsets = [1, 0, 0], sizes = [1, 8, 256], strides = [1, 1, 1]} : vector<2x8x256xf32> to vector<1x8x256xf32>
    %60 = vector.shape_cast %59 : vector<1x8x256xf32> to vector<8x256xf32>
    %c24_20 = arith.constant 24 : index
    %c256_21 = arith.constant 256 : index
    %61 = vector.load %arg4[%c24_20, %c256_21] : memref<72x512xf32, #tpu.memory_space<vmem>>, vector<8x256xf32>
    tpu.vector_store %arg4[%c24_20, %c256_21], %60 {strides = array<i32>} : memref<72x512xf32, #tpu.memory_space<vmem>>, vector<8x256xf32>,
    %62 = vector.extract_strided_slice %0 {offsets = [0, 0, 0], sizes = [1, 8, 256], strides = [1, 1, 1]} : vector<2x8x256xf32> to vector<1x8x256xf32>
    %63 = vector.shape_cast %62 : vector<1x8x256xf32> to vector<8x256xf32>
    %c32 = arith.constant 32 : index
    %c0_22 = arith.constant 0 : index
    %64 = vector.load %arg4[%c32, %c0_22] : memref<72x512xf32, #tpu.memory_space<vmem>>, vector<8x256xf32>
    tpu.vector_store %arg4[%c32, %c0_22], %63 {strides = array<i32>} : memref<72x512xf32, #tpu.memory_space<vmem>>, vector<8x256xf32>,
    %65 = vector.extract_strided_slice %0 {offsets = [1, 0, 0], sizes = [1, 8, 256], strides = [1, 1, 1]} : vector<2x8x256xf32> to vector<1x8x256xf32>
    %66 = vector.shape_cast %65 : vector<1x8x256xf32> to vector<8x256xf32>
    %c32_23 = arith.constant 32 : index
    %c256_24 = arith.constant 256 : index
    %67 = vector.load %arg4[%c32_23, %c256_24] : memref<72x512xf32, #tpu.memory_space<vmem>>, vector<8x256xf32>
    tpu.vector_store %arg4[%c32_23, %c256_24], %66 {strides = array<i32>} : memref<72x512xf32, #tpu.memory_space<vmem>>, vector<8x256xf32>,
    %c255_i32 = arith.constant 255 : i32
    %68 = tpu.dynamic_rotate %0 by %c255_i32 dim 2 : vector<2x8x256xf32>, i32 -> vector<2x8x256xf32>
    %cst_25 = arith.constant 0.000000e+00 : f32
    %69 = vector.shape_cast %13 : vector<1x1x256xi1> to vector<1x1x256xi1>
    %70 = vector.broadcast %69 : vector<1x1x256xi1> to vector<2x8x256xi1>
    %71 = vector.broadcast %cst_25 : f32 to vector<2x8x256xf32>
    %72 = arith.select %70, %68, %71 : vector<2x8x256xi1>, vector<2x8x256xf32>
    %73 = vector.extract_strided_slice %72 {offsets = [0, 0, 0], sizes = [1, 8, 256], strides = [1, 1, 1]} : vector<2x8x256xf32> to vector<1x8x256xf32>
    %74 = vector.shape_cast %73 : vector<1x8x256xf32> to vector<8x256xf32>
    %c40 = arith.constant 40 : index
    %c0_26 = arith.constant 0 : index
    %75 = vector.load %arg4[%c40, %c0_26] : memref<72x512xf32, #tpu.memory_space<vmem>>, vector<8x256xf32>
    tpu.vector_store %arg4[%c40, %c0_26], %74 {strides = array<i32>} : memref<72x512xf32, #tpu.memory_space<vmem>>, vector<8x256xf32>,
    %76 = vector.extract_strided_slice %72 {offsets = [1, 0, 0], sizes = [1, 8, 256], strides = [1, 1, 1]} : vector<2x8x256xf32> to vector<1x8x256xf32>
    %77 = vector.shape_cast %76 : vector<1x8x256xf32> to vector<8x256xf32>
    %c40_27 = arith.constant 40 : index
    %c256_28 = arith.constant 256 : index
    %78 = vector.load %arg4[%c40_27, %c256_28] : memref<72x512xf32, #tpu.memory_space<vmem>>, vector<8x256xf32>
    tpu.vector_store %arg4[%c40_27, %c256_28], %77 {strides = array<i32>} : memref<72x512xf32, #tpu.memory_space<vmem>>, vector<8x256xf32>,
    %c241_i32 = arith.constant 241 : i32
    %79 = tpu.dynamic_rotate %0 by %c241_i32 dim 2 : vector<2x8x256xf32>, i32 -> vector<2x8x256xf32>
    %cst_29 = arith.constant 0.000000e+00 : f32
    %80 = vector.shape_cast %16 : vector<1x1x256xi1> to vector<1x1x256xi1>
    %81 = vector.broadcast %80 : vector<1x1x256xi1> to vector<2x8x256xi1>
    %82 = vector.broadcast %cst_29 : f32 to vector<2x8x256xf32>
    %83 = arith.select %81, %79, %82 : vector<2x8x256xi1>, vector<2x8x256xf32>
    %84 = vector.extract_strided_slice %83 {offsets = [0, 0, 0], sizes = [1, 8, 256], strides = [1, 1, 1]} : vector<2x8x256xf32> to vector<1x8x256xf32>
    %85 = vector.shape_cast %84 : vector<1x8x256xf32> to vector<8x256xf32>
    %c48 = arith.constant 48 : index
    %c0_30 = arith.constant 0 : index
    %86 = vector.load %arg4[%c48, %c0_30] : memref<72x512xf32, #tpu.memory_space<vmem>>, vector<8x256xf32>
    tpu.vector_store %arg4[%c48, %c0_30], %85 {strides = array<i32>} : memref<72x512xf32, #tpu.memory_space<vmem>>, vector<8x256xf32>,
    %87 = vector.extract_strided_slice %83 {offsets = [1, 0, 0], sizes = [1, 8, 256], strides = [1, 1, 1]} : vector<2x8x256xf32> to vector<1x8x256xf32>
    %88 = vector.shape_cast %87 : vector<1x8x256xf32> to vector<8x256xf32>
    %c48_31 = arith.constant 48 : index
    %c256_32 = arith.constant 256 : index
    %89 = vector.load %arg4[%c48_31, %c256_32] : memref<72x512xf32, #tpu.memory_space<vmem>>, vector<8x256xf32>
    tpu.vector_store %arg4[%c48_31, %c256_32], %88 {strides = array<i32>} : memref<72x512xf32, #tpu.memory_space<vmem>>, vector<8x256xf32>,
    %c240_i32 = arith.constant 240 : i32
    %90 = tpu.dynamic_rotate %0 by %c240_i32 dim 2 : vector<2x8x256xf32>, i32 -> vector<2x8x256xf32>
    %cst_33 = arith.constant 0.000000e+00 : f32
    %91 = vector.shape_cast %9 : vector<1x1x256xi1> to vector<1x1x256xi1>
    %92 = vector.broadcast %91 : vector<1x1x256xi1> to vector<2x8x256xi1>
    %93 = vector.broadcast %cst_33 : f32 to vector<2x8x256xf32>
    %94 = arith.select %92, %90, %93 : vector<2x8x256xi1>, vector<2x8x256xf32>
    %95 = vector.extract_strided_slice %94 {offsets = [0, 0, 0], sizes = [1, 8, 256], strides = [1, 1, 1]} : vector<2x8x256xf32> to vector<1x8x256xf32>
    %96 = vector.shape_cast %95 : vector<1x8x256xf32> to vector<8x256xf32>
    %c56 = arith.constant 56 : index
    %c0_34 = arith.constant 0 : index
    %97 = vector.load %arg4[%c56, %c0_34] : memref<72x512xf32, #tpu.memory_space<vmem>>, vector<8x256xf32>
    tpu.vector_store %arg4[%c56, %c0_34], %96 {strides = array<i32>} : memref<72x512xf32, #tpu.memory_space<vmem>>, vector<8x256xf32>,
    %98 = vector.extract_strided_slice %94 {offsets = [1, 0, 0], sizes = [1, 8, 256], strides = [1, 1, 1]} : vector<2x8x256xf32> to vector<1x8x256xf32>
    %99 = vector.shape_cast %98 : vector<1x8x256xf32> to vector<8x256xf32>
    %c56_35 = arith.constant 56 : index
    %c256_36 = arith.constant 256 : index
    %100 = vector.load %arg4[%c56_35, %c256_36] : memref<72x512xf32, #tpu.memory_space<vmem>>, vector<8x256xf32>
    tpu.vector_store %arg4[%c56_35, %c256_36], %99 {strides = array<i32>} : memref<72x512xf32, #tpu.memory_space<vmem>>, vector<8x256xf32>,
    %c239_i32 = arith.constant 239 : i32
    %101 = tpu.dynamic_rotate %0 by %c239_i32 dim 2 : vector<2x8x256xf32>, i32 -> vector<2x8x256xf32>
    %cst_37 = arith.constant 0.000000e+00 : f32
    %102 = vector.shape_cast %17 : vector<1x1x256xi1> to vector<1x1x256xi1>
    %103 = vector.broadcast %102 : vector<1x1x256xi1> to vector<2x8x256xi1>
    %104 = vector.broadcast %cst_37 : f32 to vector<2x8x256xf32>
    %105 = arith.select %103, %101, %104 : vector<2x8x256xi1>, vector<2x8x256xf32>
    %106 = vector.extract_strided_slice %105 {offsets = [0, 0, 0], sizes = [1, 8, 256], strides = [1, 1, 1]} : vector<2x8x256xf32> to vector<1x8x256xf32>
    %107 = vector.shape_cast %106 : vector<1x8x256xf32> to vector<8x256xf32>
    %c64 = arith.constant 64 : index
    %c0_38 = arith.constant 0 : index
    %108 = vector.load %arg4[%c64, %c0_38] : memref<72x512xf32, #tpu.memory_space<vmem>>, vector<8x256xf32>
    tpu.vector_store %arg4[%c64, %c0_38], %107 {strides = array<i32>} : memref<72x512xf32, #tpu.memory_space<vmem>>, vector<8x256xf32>,
    %109 = vector.extract_strided_slice %105 {offsets = [1, 0, 0], sizes = [1, 8, 256], strides = [1, 1, 1]} : vector<2x8x256xf32> to vector<1x8x256xf32>
    %110 = vector.shape_cast %109 : vector<1x8x256xf32> to vector<8x256xf32>
    %c64_39 = arith.constant 64 : index
    %c256_40 = arith.constant 256 : index
    %111 = vector.load %arg4[%c64_39, %c256_40] : memref<72x512xf32, #tpu.memory_space<vmem>>, vector<8x256xf32>
    tpu.vector_store %arg4[%c64_39, %c256_40], %110 {strides = array<i32>} : memref<72x512xf32, #tpu.memory_space<vmem>>, vector<8x256xf32>,
    %c0_41 = arith.constant 0 : index
    %c0_42 = arith.constant 0 : index
    %112 = vector.load %arg1[%c0_41, %c0_42] : memref<8x72xf32, #tpu.memory_space<vmem>>, vector<8x72xf32>
    %c0_43 = arith.constant 0 : index
    %c0_44 = arith.constant 0 : index
    %113 = vector.load %arg4[%c0_43, %c0_44] : memref<72x512xf32, #tpu.memory_space<vmem>>, vector<72x512xf32>
    %cst_45 = arith.constant dense<0.000000e+00> : vector<8x512xf32>
    %114 = tpu.matmul %112, %113, %cst_45 {dimension_numbers = #tpu.dot_dimension_numbers<[1], [0], [0], [1], [0, 0, 1, 1], [], []>} : vector<8x72xf32>, vector<72x512xf32>, vector<8x512xf32> -> vector<8x512xf32>
    %c0_46 = arith.constant 0 : index
    %c0_47 = arith.constant 0 : index
    %115 = vector.load %arg2[%c0_46, %c0_47] : memref<8x1xf32, #tpu.memory_space<vmem>>, vector<8x1xf32>
    %116 = vector.broadcast %115 : vector<8x1xf32> to vector<8x512xf32>
    %117 = arith.addf %114, %116 : vector<8x512xf32>
    %cst_48 = arith.constant 0.000000e+00 : f32
    %118 = vector.broadcast %cst_48 : f32 to vector<8x512xf32>
    %119 = arith.cmpf oge, %117, %118 : vector<8x512xf32>
    %cst_49 = arith.constant 1.000000e-01 : f32
    %120 = vector.broadcast %cst_49 : f32 to vector<8x512xf32>
    %121 = arith.mulf %120, %117 : vector<8x512xf32>
    %122 = arith.select %119, %117, %121 : vector<8x512xi1>, vector<8x512xf32>
    %123 = vector.extract_strided_slice %122 {offsets = [0, 0], sizes = [8, 256], strides = [1, 1]} : vector<8x512xf32> to vector<8x256xf32>
    %c0_50 = arith.constant 0 : index
    %c0_51 = arith.constant 0 : index
    %c0_52 = arith.constant 0 : index
    %124 = vector.load %arg3[%c0_50, %c0_51, %c0_52] : memref<2x8x256xf32, #tpu.memory_space<vmem>>, vector<1x8x256xf32>
    %125 = vector.shape_cast %124 : vector<1x8x256xf32> to vector<8x256xf32>
    %126 = vector.shape_cast %123 : vector<8x256xf32> to vector<1x8x256xf32>
    tpu.vector_store %arg3[%c0_50, %c0_51, %c0_52], %126 {strides = array<i32>} : memref<2x8x256xf32, #tpu.memory_space<vmem>>, vector<1x8x256xf32>,
    %127 = vector.extract_strided_slice %122 {offsets = [0, 256], sizes = [8, 256], strides = [1, 1]} : vector<8x512xf32> to vector<8x256xf32>
    %c1 = arith.constant 1 : index
    %c0_53 = arith.constant 0 : index
    %c0_54 = arith.constant 0 : index
    %128 = vector.load %arg3[%c1, %c0_53, %c0_54] : memref<2x8x256xf32, #tpu.memory_space<vmem>>, vector<1x8x256xf32>
    %129 = vector.shape_cast %128 : vector<1x8x256xf32> to vector<8x256xf32>
    %130 = vector.shape_cast %127 : vector<8x256xf32> to vector<1x8x256xf32>
    tpu.vector_store %arg3[%c1, %c0_53, %c0_54], %130 {strides = array<i32>} : memref<2x8x256xf32, #tpu.memory_space<vmem>>, vector<1x8x256xf32>,
    return
  }
}

</mosaic_0001>

<llo_original>
// kernel: cnn_block_forward.1
$region0: #{cnn_block_forward.1}
  #allocation0 [shape = 'u32[]', space=smem, size = 0x4, offset = 0x4, fixed_abs, tag = 'smem constant byte address 0x4 - core index']
  #allocation1 [shape = 'u32[144,128]{1,0:T(1,128)}', space=vmem, size = 0x12000, scoped, tag = 'internal scratch']
  #allocation2 [shape = 'f32[72,512]{1,0:T(8,128)}', space=vmem, size = 0x24000, scoped, tag = 'scratch operand']
  %s0 = inlined_call_operand.vmem [shape: f32[2,8,256], index: 0, kind: input, shape index: {}]
  %s1 = inlined_call_operand.vmem [shape: f32[8,72], index: 1, kind: input, shape index: {}]
  %s2 = inlined_call_operand.vmem [shape: f32[8,1], index: 2, kind: input, shape index: {}]
  %s3 = inlined_call_operand.vmem [shape: f32[2,8,256], index: 3, kind: output, shape index: {}]
  %s4 = sld [smem:[#allocation0]]
  $region22: #{cnn_block_forward.1} parent=0
    _
  %s6 = ssub.s32 1, %s4
  %s7 = scalar_select 0, %s6, %s4
  // Predicated region
  $region2: #{cnn_block_forward.1} parent=0 // pred_check
    _
  $region3: #{cnn_block_forward.1} parent=0 // pred_check_branch
    %9 = sbr.rel (0) target = $region5
  $region4: #{cnn_block_forward.1} parent=0 // pred_region
    _
  $region5: #{cnn_block_forward.1} parent=0 // pred_fallthru
    _
  // Predicated region
  $region6: #{cnn_block_forward.1} parent=0 // pred_check
    _
  $region7: #{cnn_block_forward.1} parent=0 // pred_check_branch
    %11 = sbr.rel (0) target = $region9
  $region8: #{cnn_block_forward.1} parent=0 // pred_region
    _
  $region9: #{cnn_block_forward.1} parent=0 // pred_fallthru
    _
  // Predicated region
  $region10: #{cnn_block_forward.1} parent=0 // pred_check
    _
  $region11: #{cnn_block_forward.1} parent=0 // pred_check_branch
    %13 = sbr.rel (0) target = $region13
  $region12: #{cnn_block_forward.1} parent=0 // pred_region
    _
  $region13: #{cnn_block_forward.1} parent=0 // pred_fallthru
    _
  %v14 = vld [vmem:[%s0] sm:$0xff]
  %v15 = vld [vmem:[%s0 + $0x8] sm:$0xff]
  %v16 = vld [vmem:[%s0 + $0x10] sm:$0xff]
  %v17 = vld [vmem:[%s0 + $0x18] sm:$0xff]
  %v18 = vlaneseq
  %v19 = vand.u32 %v18, 127
  %v20 = vadd.s32 %v19, 128
  %v21 = vshra.s32 %v19, 4
  %v22 = vshra.s32 %v20, 4
  %v23 = vand.u32 %v19, 15
  %v24 = vand.u32 %v20, 15
  %vm25 = vcmp.ge.s32.totalorder %v21, 1
  %vm26 = vcmp.ge.s32.totalorder %v22, 1
  %vm27 = vcmp.lt.s32.totalorder %v21, 15
  %vm28 = vcmp.lt.s32.totalorder %v22, 15
  %vm29 = vcmp.ge.s32.totalorder %v23, 1
  %vm30 = vcmp.ge.s32.totalorder %v24, 1
  %vm31 = vcmp.lt.s32.totalorder %v23, 15
  %vm32 = vcmp.lt.s32.totalorder %v24, 15
  %vm33 = vmand %vm25, %vm29
  %vm34 = vmand %vm26, %vm30
  %vm35 = vmand %vm25, %vm31
  %vm36 = vmand %vm26, %vm32
  %vm37 = vmand %vm27, %vm29
  %vm38 = vmand %vm28, %vm30
  %vm39 = vmand %vm27, %vm31
  %vm40 = vmand %vm28, %vm32
  %41 = vrot.lane.b32.xlu0 %v14, 17
  %v42 = vpop.permute.xlu0 %41
  %43 = vrot.lane.b32.xlu0 %v16, 17
  %v44 = vpop.permute.xlu0 %43
  %45 = vrot.lane.b32.xlu0 %v15, 17
  %v46 = vpop.permute.xlu0 %45
  %47 = vrot.lane.b32.xlu0 %v17, 17
  %v48 = vpop.permute.xlu0 %47
  %vm49 = vcmp.lt.s32.totalorder %v19, 17
  %v50 = vsel %vm49, %v42, %v46
  %v51 = vsel %vm49, %v44, %v48
  %v52 = vsel %vm49, %v46, %v42
  %v53 = vsel %vm49, %v48, %v44
  %v54 = vsel %vm33, 1, 0
  %v55 = vsel %vm34, 1, 0
  %vm56 = vcmp.eq.s32.totalorder %v54, 1
  %vm57 = vcmp.eq.s32.totalorder %v55, 1
  %v58 = vsel %vm56, %v52, 0.0
  %v59 = vsel %vm57, %v50, 0.0
  %v60 = vsel %vm56, %v53, 0.0
  %v61 = vsel %vm57, %v51, 0.0
  %62 = vst [vmem:[#allocation2] sm:$0xff] %v58
  %63 = vst [vmem:[#allocation2 + $0x8] sm:$0xff] %v59
  %64 = vst [vmem:[#allocation2 + $0x10] sm:$0xff] %v60
  %65 = vst [vmem:[#allocation2 + $0x18] sm:$0xff] %v61
  %66 = vrot.lane.b32.xlu0 %v14, 16
  %v67 = vpop.permute.xlu0 %66
  %68 = vrot.lane.b32.xlu0 %v16, 16
  %v69 = vpop.permute.xlu0 %68
  %70 = vrot.lane.b32.xlu0 %v15, 16
  %v71 = vpop.permute.xlu0 %70
  %72 = vrot.lane.b32.xlu0 %v17, 16
  %v73 = vpop.permute.xlu0 %72
  %vm74 = vcmp.lt.s32.totalorder %v19, 16
  %v75 = vsel %vm74, %v67, %v71
  %v76 = vsel %vm74, %v69, %v73
  %v77 = vsel %vm74, %v71, %v67
  %v78 = vsel %vm74, %v73, %v69
  %v79 = vsel %vm25, 1, 0
  %v80 = vsel %vm26, 1, 0
  %vm81 = vcmp.eq.s32.totalorder %v79, 1
  %vm82 = vcmp.eq.s32.totalorder %v80, 1
  %v83 = vsel %vm81, %v77, 0.0
  %v84 = vsel %vm82, %v75, 0.0
  %v85 = vsel %vm81, %v78, 0.0
  %v86 = vsel %vm82, %v76, 0.0
  %87 = vst [vmem:[#allocation2 + $0x20] sm:$0xff] %v83
  %88 = vst [vmem:[#allocation2 + $0x28] sm:$0xff] %v84
  %89 = vst [vmem:[#allocation2 + $0x30] sm:$0xff] %v85
  %90 = vst [vmem:[#allocation2 + $0x38] sm:$0xff] %v86
  %91 = vrot.lane.b32.xlu0 %v14, 15
  %v92 = vpop.permute.xlu0 %91
  %93 = vrot.lane.b32.xlu0 %v16, 15
  %v94 = vpop.permute.xlu0 %93
  %95 = vrot.lane.b32.xlu0 %v15, 15
  %v96 = vpop.permute.xlu0 %95
  %97 = vrot.lane.b32.xlu0 %v17, 15
  %v98 = vpop.permute.xlu0 %97
  %vm99 = vcmp.lt.s32.totalorder %v19, 15
  %v100 = vsel %vm99, %v92, %v96
  %v101 = vsel %vm99, %v94, %v98
  %v102 = vsel %vm99, %v96, %v92
  %v103 = vsel %vm99, %v98, %v94
  %v104 = vsel %vm35, 1, 0
  %v105 = vsel %vm36, 1, 0
  %vm106 = vcmp.eq.s32.totalorder %v104, 1
  %vm107 = vcmp.eq.s32.totalorder %v105, 1
  %v108 = vsel %vm106, %v102, 0.0
  %v109 = vsel %vm107, %v100, 0.0
  %v110 = vsel %vm106, %v103, 0.0
  %v111 = vsel %vm107, %v101, 0.0
  %112 = vst [vmem:[#allocation2 + $0x40] sm:$0xff] %v108
  %113 = vst [vmem:[#allocation2 + $0x48] sm:$0xff] %v109
  %114 = vst [vmem:[#allocation2 + $0x50] sm:$0xff] %v110
  %115 = vst [vmem:[#allocation2 + $0x58] sm:$0xff] %v111
  %116 = vrot.lane.b32.xlu0 %v14, 1
  %v117 = vpop.permute.xlu0 %116
  %118 = vrot.lane.b32.xlu0 %v16, 1
  %v119 = vpop.permute.xlu0 %118
  %120 = vrot.lane.b32.xlu0 %v15, 1
  %v121 = vpop.permute.xlu0 %120
  %122 = vrot.lane.b32.xlu0 %v17, 1
  %v123 = vpop.permute.xlu0 %122
  %vm124 = vcmp.lt.s32.totalorder %v19, 1
  %v125 = vsel %vm124, %v117, %v121
  %v126 = vsel %vm124, %v119, %v123
  %v127 = vsel %vm124, %v121, %v117
  %v128 = vsel %vm124, %v123, %v119
  %v129 = vsel %vm29, 1, 0
  %v130 = vsel %vm30, 1, 0
  %vm131 = vcmp.eq.s32.totalorder %v129, 1
  %vm132 = vcmp.eq.s32.totalorder %v130, 1
  %v133 = vsel %vm131, %v127, 0.0
  %v134 = vsel %vm132, %v125, 0.0
  %v135 = vsel %vm131, %v128, 0.0
  %v136 = vsel %vm132, %v126, 0.0
  %137 = vst [vmem:[#allocation2 + $0x60] sm:$0xff] %v133
  %138 = vst [vmem:[#allocation2 + $0x68] sm:$0xff] %v134
  %139 = vst [vmem:[#allocation2 + $0x70] sm:$0xff] %v135
  %140 = vst [vmem:[#allocation2 + $0x78] sm:$0xff] %v136
  %141 = vst [vmem:[#allocation2 + $0x80] sm:$0xff] %v14
  %142 = vst [vmem:[#allocation2 + $0x88] sm:$0xff] %v15
  %143 = vst [vmem:[#allocation2 + $0x90] sm:$0xff] %v16
  %144 = vst [vmem:[#allocation2 + $0x98] sm:$0xff] %v17
  %145 = vrot.lane.b32.xlu0 %v14, 127
  %v146 = vpop.permute.xlu0 %145
  %147 = vrot.lane.b32.xlu0 %v16, 127
  %v148 = vpop.permute.xlu0 %147
  %149 = vrot.lane.b32.xlu0 %v15, 127
  %v150 = vpop.permute.xlu0 %149
  %151 = vrot.lane.b32.xlu0 %v17, 127
  %v152 = vpop.permute.xlu0 %151
  %vm153 = vcmp.lt.s32.totalorder %v19, 127
  %v154 = vsel %vm153, %v146, %v150
  %v155 = vsel %vm153, %v148, %v152
  %v156 = vsel %vm153, %v150, %v146
  %v157 = vsel %vm153, %v152, %v148
  %v158 = vsel %vm31, 1, 0
  %v159 = vsel %vm32, 1, 0
  %vm160 = vcmp.eq.s32.totalorder %v158, 1
  %vm161 = vcmp.eq.s32.totalorder %v159, 1
  %v162 = vsel %vm160, %v154, 0.0
  %v163 = vsel %vm161, %v156, 0.0
  %v164 = vsel %vm160, %v155, 0.0
  %v165 = vsel %vm161, %v157, 0.0
  %166 = vst [vmem:[#allocation2 + $0xa0] sm:$0xff] %v162
  %167 = vst [vmem:[#allocation2 + $0xa8] sm:$0xff] %v163
  %168 = vst [vmem:[#allocation2 + $0xb0] sm:$0xff] %v164
  %169 = vst [vmem:[#allocation2 + $0xb8] sm:$0xff] %v165
  %170 = vrot.lane.b32.xlu0 %v14, 113
  %v171 = vpop.permute.xlu0 %170
  %172 = vrot.lane.b32.xlu0 %v16, 113
  %v173 = vpop.permute.xlu0 %172
  %174 = vrot.lane.b32.xlu0 %v15, 113
  %v175 = vpop.permute.xlu0 %174
  %176 = vrot.lane.b32.xlu0 %v17, 113
  %v177 = vpop.permute.xlu0 %176
  %vm178 = vcmp.lt.s32.totalorder %v19, 113
  %v179 = vsel %vm178, %v171, %v175
  %v180 = vsel %vm178, %v173, %v177
  %v181 = vsel %vm178, %v175, %v171
  %v182 = vsel %vm178, %v177, %v173
  %v183 = vsel %vm37, 1, 0
  %v184 = vsel %vm38, 1, 0
  %vm185 = vcmp.eq.s32.totalorder %v183, 1
  %vm186 = vcmp.eq.s32.totalorder %v184, 1
  %v187 = vsel %vm185, %v179, 0.0
  %v188 = vsel %vm186, %v181, 0.0
  %v189 = vsel %vm185, %v180, 0.0
  %v190 = vsel %vm186, %v182, 0.0
  %191 = vst [vmem:[#allocation2 + $0xc0] sm:$0xff] %v187
  %192 = vst [vmem:[#allocation2 + $0xc8] sm:$0xff] %v188
  %193 = vst [vmem:[#allocation2 + $0xd0] sm:$0xff] %v189
  %194 = vst [vmem:[#allocation2 + $0xd8] sm:$0xff] %v190
  %195 = vrot.lane.b32.xlu0 %v14, 112
  %v196 = vpop.permute.xlu0 %195
  %197 = vrot.lane.b32.xlu0 %v16, 112
  %v198 = vpop.permute.xlu0 %197
  %199 = vrot.lane.b32.xlu0 %v15, 112
  %v200 = vpop.permute.xlu0 %199
  %201 = vrot.lane.b32.xlu0 %v17, 112
  %v202 = vpop.permute.xlu0 %201
  %vm203 = vcmp.lt.s32.totalorder %v19, 112
  %v204 = vsel %vm203, %v196, %v200
  %v205 = vsel %vm203, %v198, %v202
  %v206 = vsel %vm203, %v200, %v196
  %v207 = vsel %vm203, %v202, %v198
  %v208 = vsel %vm27, 1, 0
  %v209 = vsel %vm28, 1, 0
  %vm210 = vcmp.eq.s32.totalorder %v208, 1
  %vm211 = vcmp.eq.s32.totalorder %v209, 1
  %v212 = vsel %vm210, %v204, 0.0
  %v213 = vsel %vm211, %v206, 0.0
  %v214 = vsel %vm210, %v205, 0.0
  %v215 = vsel %vm211, %v207, 0.0
  %216 = vst [vmem:[#allocation2 + $0xe0] sm:$0xff] %v212
  %217 = vst [vmem:[#allocation2 + $0xe8] sm:$0xff] %v213
  %218 = vst [vmem:[#allocation2 + $0xf0] sm:$0xff] %v214
  %219 = vst [vmem:[#allocation2 + $0xf8] sm:$0xff] %v215
  %220 = vrot.lane.b32.xlu0 %v14, 111
  %v221 = vpop.permute.xlu0 %220
  %222 = vrot.lane.b32.xlu0 %v16, 111
  %v223 = vpop.permute.xlu0 %222
  %224 = vrot.lane.b32.xlu0 %v15, 111
  %v225 = vpop.permute.xlu0 %224
  %226 = vrot.lane.b32.xlu0 %v17, 111
  %v227 = vpop.permute.xlu0 %226
  %vm228 = vcmp.lt.s32.totalorder %v19, 111
  %v229 = vsel %vm228, %v221, %v225
  %v230 = vsel %vm228, %v223, %v227
  %v231 = vsel %vm228, %v225, %v221
  %v232 = vsel %vm228, %v227, %v223
  %v233 = vsel %vm39, 1, 0
  %v234 = vsel %vm40, 1, 0
  %vm235 = vcmp.eq.s32.totalorder %v233, 1
  %vm236 = vcmp.eq.s32.totalorder %v234, 1
  %v237 = vsel %vm235, %v229, 0.0
  %v238 = vsel %vm236, %v231, 0.0
  %v239 = vsel %vm235, %v230, 0.0
  %v240 = vsel %vm236, %v232, 0.0
  %241 = vst [vmem:[#allocation2 + $0x100] sm:$0xff] %v237
  %242 = vst [vmem:[#allocation2 + $0x108] sm:$0xff] %v238
  %243 = vst [vmem:[#allocation2 + $0x110] sm:$0xff] %v239
  %244 = vst [vmem:[#allocation2 + $0x118] sm:$0xff] %v240
  %v245 = vld [vmem:[%s1] sm:$0xff]
  %v246 = vld [vmem:[#allocation2] sm:$0xff]
  %v247 = vld [vmem:[#allocation2 + $0x8] sm:$0xff]
  %v248 = vld [vmem:[#allocation2 + $0x10] sm:$0xff]
  %v249 = vld [vmem:[#allocation2 + $0x18] sm:$0xff]
  %v250 = vld [vmem:[#allocation2 + $0x20] sm:$0xff]
  %v251 = vld [vmem:[#allocation2 + $0x28] sm:$0xff]
  %v252 = vld [vmem:[#allocation2 + $0x30] sm:$0xff]
  %v253 = vld [vmem:[#allocation2 + $0x38] sm:$0xff]
  %v254 = vld [vmem:[#allocation2 + $0x40] sm:$0xff]
  %v255 = vld [vmem:[#allocation2 + $0x48] sm:$0xff]
  %v256 = vld [vmem:[#allocation2 + $0x50] sm:$0xff]
  %v257 = vld [vmem:[#allocation2 + $0x58] sm:$0xff]
  %v258 = vld [vmem:[#allocation2 + $0x60] sm:$0xff]
  %v259 = vld [vmem:[#allocation2 + $0x68] sm:$0xff]
  %v260 = vld [vmem:[#allocation2 + $0x70] sm:$0xff]
  %v261 = vld [vmem:[#allocation2 + $0x78] sm:$0xff]
  %v262 = vld [vmem:[#allocation2 + $0x80] sm:$0xff]
  %v263 = vld [vmem:[#allocation2 + $0x88] sm:$0xff]
  %v264 = vld [vmem:[#allocation2 + $0x90] sm:$0xff]
  %v265 = vld [vmem:[#allocation2 + $0x98] sm:$0xff]
  %v266 = vld [vmem:[#allocation2 + $0xa0] sm:$0xff]
  %v267 = vld [vmem:[#allocation2 + $0xa8] sm:$0xff]
  %v268 = vld [vmem:[#allocation2 + $0xb0] sm:$0xff]
  %v269 = vld [vmem:[#allocation2 + $0xb8] sm:$0xff]
  %v270 = vld [vmem:[#allocation2 + $0xc0] sm:$0xff]
  %v271 = vld [vmem:[#allocation2 + $0xc8] sm:$0xff]
  %v272 = vld [vmem:[#allocation2 + $0xd0] sm:$0xff]
  %v273 = vld [vmem:[#allocation2 + $0xd8] sm:$0xff]
  %v274 = vld [vmem:[#allocation2 + $0xe0] sm:$0xff]
  %v275 = vld [vmem:[#allocation2 + $0xe8] sm:$0xff]
  %v276 = vld [vmem:[#allocation2 + $0xf0] sm:$0xff]
  %v277 = vld [vmem:[#allocation2 + $0xf8] sm:$0xff]
  %v278 = vld [vmem:[#allocation2 + $0x100] sm:$0xff]
  %v279 = vld [vmem:[#allocation2 + $0x108] sm:$0xff]
  %v280 = vld [vmem:[#allocation2 + $0x110] sm:$0xff]
  %v281 = vld [vmem:[#allocation2 + $0x118] sm:$0xff]
  %v282 = vld [vmem:[%s2] sm:$0xff]
  %284 = vset.pattern.permute.xlu0 0
  %285 = vperm.xlu0 %284, %v282
  %v286 = vpop.permute.xlu0 %285
  %vm288 = vcmask 588800
  %v290 = vsel %vm288, %v245, 0
  %292 = vmatprep.subr.mxu0 %v247
  %293 = vmatpush1.msra.mxu0 %v246
  %294 = vmatprep.subr.mxu0 %v251
  %295 = vmatpush1.msra.mxu0 %v250
  %296 = vmatprep.subr.mxu0 %v255
  %297 = vmatpush1.msra.mxu0 %v254
  %298 = vmatprep.subr.mxu0 %v259
  %299 = vmatpush1.msra.mxu0 %v258
  %300 = vmatprep.subr.mxu0 %v263
  %301 = vmatpush1.msra.mxu0 %v262
  %302 = vmatprep.subr.mxu0 %v267
  %303 = vmatpush1.msra.mxu0 %v266
  %304 = vmatprep.subr.mxu0 %v271
  %305 = vmatpush1.msra.mxu0 %v270
  %306 = vmatprep.subr.mxu0 %v275
  %307 = vmatpush1.msra.mxu0 %v274
  %308 = vmatprep.subr.mxu0 %v279
  %309 = vmatpush1.msra.mxu0 %v278
  %310 = vmatprep.subr.mxu0 0.0
  %311 = vmatpush1.msra.mxu0 0.0
  %312 = vmatprep.subr.mxu0 0.0
  %313 = vmatpush1.msra.mxu0 0.0
  %314 = vmatprep.subr.mxu0 0.0
  %315 = vmatpush1.msra.mxu0 0.0
  %316 = vmatprep.subr.mxu0 0.0
  %317 = vmatpush1.msra.mxu0 0.0
  %318 = vmatprep.subr.mxu0 0.0
  %319 = vmatpush1.msra.mxu0 0.0
  %320 = vmatprep.subr.mxu0 0.0
  %321 = vmatpush1.msra.mxu0 0.0
  %322 = vmatprep.subr.mxu0 0.0
  %323 = vmatpush1.msra.mxu0 0.0
  %324 = vmatprep.subr.mxu0 0.0
  %325 = vmatpush1.msra.mxu0 0.0
  %326 = vmatprep.subr.mxu0 0.0
  %327 = vmatpush1.msra.mxu0 0.0
  %328 = vmatprep.subr.mxu0 0.0
  %329 = vmatpush1.msra.mxu0 0.0
  %330 = vmatprep.subr.mxu0 0.0
  %331 = vmatpush1.msra.mxu0 0.0
  %332 = vmatprep.subr.mxu0 0.0
  %333 = vmatpush1.msra.mxu0 0.0
  %334 = vmatprep.subr.mxu0 0.0
  %335 = vmatpush1.msra.mxu0 0.0
  %336 = vmatprep.subr.mxu0 0.0
  %337 = vmatpush1.msra.mxu0 0.0
  %338 = vmatprep.subr.mxu0 0.0
  %339 = vmatpush1.msra.mxu0 0.0
  %340 = vmatprep.subr.mxu0 0.0
  %341 = vmatpush1.msra.mxu0 0.0
  %342 = vmatprep.subr.mxu0 0.0
  %343 = vmatpush1.msra.mxu0 0.0
  %344 = vmatprep.subr.mxu0 0.0
  %345 = vmatpush1.msra.mxu0 0.0
  %346 = vmatprep.subr.mxu0 0.0
  %347 = vmatpush1.msra.mxu0 0.0
  %348 = vmatprep.subr.mxu0 0.0
  %349 = vmatpush1.msra.mxu0 0.0
  %350 = vmatprep.subr.mxu0 0.0
  %351 = vmatpush1.msra.mxu0 0.0
  %352 = vmatprep.subr.mxu0 0.0
  %353 = vmatpush1.msra.mxu0 0.0
  %354 = vmatprep.subr.mxu0 0.0
  %355 = vmatpush1.msra.mxu0 0.0
  %356 = vmatprep.mubr.f32.mxu0 0.0
  %357 = vmatmul.mubr.f32.gmra.mrb[0].mxu0 %v290
  %v358 = vpop.f32.mrb[0].mxu0
  %v359 = vadd.f32 %v286, %v358
  %v360 = vpop.f32.mrb[0].mxu0
  %v361 = vadd.f32 %v286, %v360
  %362 = vdwg.mxu0
  %363 = vmatprep.subr.mxu0 %v249
  %364 = vmatpush1.msra.mxu0 %v248
  %365 = vmatprep.subr.mxu0 %v253
  %366 = vmatpush1.msra.mxu0 %v252
  %367 = vmatprep.subr.mxu0 %v257
  %368 = vmatpush1.msra.mxu0 %v256
  %369 = vmatprep.subr.mxu0 %v261
  %370 = vmatpush1.msra.mxu0 %v260
  %371 = vmatprep.subr.mxu0 %v265
  %372 = vmatpush1.msra.mxu0 %v264
  %373 = vmatprep.subr.mxu0 %v269
  %374 = vmatpush1.msra.mxu0 %v268
  %375 = vmatprep.subr.mxu0 %v273
  %376 = vmatpush1.msra.mxu0 %v272
  %377 = vmatprep.subr.mxu0 %v277
  %378 = vmatpush1.msra.mxu0 %v276
  %379 = vmatprep.subr.mxu0 %v281
  %380 = vmatpush1.msra.mxu0 %v280
  %381 = vmatprep.subr.mxu0 0.0
  %382 = vmatpush1.msra.mxu0 0.0
  %383 = vmatprep.subr.mxu0 0.0
  %384 = vmatpush1.msra.mxu0 0.0
  %385 = vmatprep.subr.mxu0 0.0
  %386 = vmatpush1.msra.mxu0 0.0
  %387 = vmatprep.subr.mxu0 0.0
  %388 = vmatpush1.msra.mxu0 0.0
  %389 = vmatprep.subr.mxu0 0.0
  %390 = vmatpush1.msra.mxu0 0.0
  %391 = vmatprep.subr.mxu0 0.0
  %392 = vmatpush1.msra.mxu0 0.0
  %393 = vmatprep.subr.mxu0 0.0
  %394 = vmatpush1.msra.mxu0 0.0
  %395 = vmatprep.subr.mxu0 0.0
  %396 = vmatpush1.msra.mxu0 0.0
  %397 = vmatprep.subr.mxu0 0.0
  %398 = vmatpush1.msra.mxu0 0.0
  %399 = vmatprep.subr.mxu0 0.0
  %400 = vmatpush1.msra.mxu0 0.0
  %401 = vmatprep.subr.mxu0 0.0
  %402 = vmatpush1.msra.mxu0 0.0
  %403 = vmatprep.subr.mxu0 0.0
  %404 = vmatpush1.msra.mxu0 0.0
  %405 = vmatprep.subr.mxu0 0.0
  %406 = vmatpush1.msra.mxu0 0.0
  %407 = vmatprep.subr.mxu0 0.0
  %408 = vmatpush1.msra.mxu0 0.0
  %409 = vmatprep.subr.mxu0 0.0
  %410 = vmatpush1.msra.mxu0 0.0
  %411 = vmatprep.subr.mxu0 0.0
  %412 = vmatpush1.msra.mxu0 0.0
  %413 = vmatprep.subr.mxu0 0.0
  %414 = vmatpush1.msra.mxu0 0.0
  %415 = vmatprep.subr.mxu0 0.0
  %416 = vmatpush1.msra.mxu0 0.0
  %417 = vmatprep.subr.mxu0 0.0
  %418 = vmatpush1.msra.mxu0 0.0
  %419 = vmatprep.subr.mxu0 0.0
  %420 = vmatpush1.msra.mxu0 0.0
  %421 = vmatprep.subr.mxu0 0.0
  %422 = vmatpush1.msra.mxu0 0.0
  %423 = vmatprep.subr.mxu0 0.0
  %424 = vmatpush1.msra.mxu0 0.0
  %425 = vmatprep.subr.mxu0 0.0
  %426 = vmatpush1.msra.mxu0 0.0
  %427 = vmatprep.mubr.f32.mxu0 0.0
  %428 = vmatmul.mubr.f32.gmra.mrb[0].mxu0 %v290
  %v429 = vpop.f32.mrb[0].mxu0
  %v430 = vadd.f32 %v286, %v429
  %v431 = vpop.f32.mrb[0].mxu0
  %v432 = vadd.f32 %v286, %v431
  %433 = vdwg.mxu0
  %vm434 = vcmp.ge.f32.partialorder %v359, 0.0
  %vm435 = vcmp.ge.f32.partialorder %v361, 0.0
  %vm436 = vcmp.ge.f32.partialorder %v430, 0.0
  %vm437 = vcmp.ge.f32.partialorder %v432, 0.0
  %v438 = vmul.f32 %v359, 0.1
  %v439 = vmul.f32 %v361, 0.1
  %v440 = vmul.f32 %v430, 0.1
  %v441 = vmul.f32 %v432, 0.1
  %v442 = vsel %vm434, %v359, %v438
  %v443 = vsel %vm435, %v361, %v439
  %v444 = vsel %vm436, %v430, %v440
  %v445 = vsel %vm437, %v432, %v441
  %446 = vst [vmem:[%s3] sm:$0xff] %v442
  %447 = vst [vmem:[%s3 + $0x8] sm:$0xff] %v443
  %s448 = scalar_lea.vmem %s3, 16
  %449 = vst [vmem:[%s448] sm:$0xff] %v444
  %450 = vst [vmem:[%s448 + $0x8] sm:$0xff] %v445
  // Predicated region
  $region14: #{cnn_block_forward.1} parent=0 // pred_check
    _
  $region15: #{cnn_block_forward.1} parent=0 // pred_check_branch
    %452 = sbr.rel (0) target = $region17
  $region16: #{cnn_block_forward.1} parent=0 // pred_region
    _
  $region17: #{cnn_block_forward.1} parent=0 // pred_fallthru
    _
  // Predicated region
  $region18: #{cnn_block_forward.1} parent=0 // pred_check
    _
  $region19: #{cnn_block_forward.1} parent=0 // pred_check_branch
    %454 = sbr.rel (0) target = $region21
  $region20: #{cnn_block_forward.1} parent=0 // pred_region
    _
  $region21: #{cnn_block_forward.1} parent=0 // pred_fallthru
    _

</llo_original>
